<compile_context>
chip_gen: v6e
topology: v6e:2x2x1
jax: 0.10.0
libtpu: 0.0.40
codegen_flags: <defaults>
</compile_context>

<pallas_src>
import functools

import jax
import jax.numpy as jnp
from jax.experimental import pallas as pl
from jax.experimental.pallas import tpu as pltpu


def _round_up(x, m):
    return ((x + m - 1) // m) * m


def _round_down(x, m):
    return (x // m) * m


def _vmem_capacity_bytes():
    """Per-core VMEM capacity; conservative default if the query fails."""
    try:
        return int(pltpu.get_tpu_info().vmem_capacity_bytes)
    except Exception:
        return 64 * 2 ** 20          # v7x per-TC size (smallest current part)


def critic_kernel(x_ref, w1_ref, b1_ref, w2_ref, b2_ref, o_ref):
    """One batch tile: o = relu(x @ w1 + b1) @ w2 + b2.

    x_ref : (TB, K)  activations (f32 or bf16)          [streamed per step]
    w1_ref: (K, H)   fc1 weight (in, out), f32           [VMEM-resident]
    b1_ref: (1, H)   fc1 bias, f32                       [VMEM-resident]
    w2_ref: (1, H)   fc2 weight as a lane-major row, f32 [VMEM-resident]
    b2_ref: (1,)     fc2 bias, SMEM scalar
    o_ref : (TB, 1)  state values, f32
    """
    # fc1 on the MXU with f32 accumulation; bias + ReLU on the VPU in f32.
    h = jnp.dot(x_ref[...], w1_ref[...], preferred_element_type=jnp.float32)
    h = jnp.maximum(h + b1_ref[...], 0.0)                        # (TB, H)
    # fc2: VPU multiply + XLU lane reduction (an N=1 MXU matmul would waste
    # the MXU).  For very wide hidden sizes (H >= ~512) an MXU dot h @ w2
    # would free VALU/XLU slots instead — immaterial at these sizes.
    v = jnp.sum(h * w2_ref[...], axis=-1, keepdims=True)         # (TB, 1)
    o_ref[...] = (v + b2_ref[0]).astype(o_ref.dtype)
    # Output stays a (TB, 1) column block: the kernel is x-load-bound (stores
    # are 1/K of the loads), so a lane-dense transposed output relayout is
    # only worth doing if a profile shows the store path binding.


def _choose_tile_rows(B, K, H, x_itemsize, budget_bytes, target_bytes):
    """Rows per grid step: big enough to amortize ~0.35 us/step overhead,
    small enough that the double-buffered x tile plus live f32 intermediates
    fit the per-core VMEM budget."""
    rows = max(8, _round_down(target_bytes // max(1, K * x_itemsize), 8))

    def step_bytes(r):
        # 2 x-tile buffers + ~2 live (r, H) f32 intermediates + 2 out buffers
        return 2 * r * K * x_itemsize + 2 * r * H * 4 + 2 * r * 4

    while rows > 8 and step_bytes(rows) > budget_bytes:
        rows = max(8, _round_down(rows // 2, 8))
    return rows


@functools.partial(jax.jit,
                   static_argnames=("block_target_bytes",
                                    "single_buffer_weights"))
def critic_forward(x, w1, b1, w2, b2, *, block_target_bytes=2 * 2 ** 20,
                   single_buffer_weights=True):
    """x: (B, K); w1: (K, H); b1: (1, H); w2: (H, 1); b2: (1, 1).
    Returns the state value, shape (B, 1) f32.

    Pass x in bf16 to halve its HBM traffic (the binding resource); the
    kernel accumulates in f32 either way.  No padding / casting passes are
    made over x in this wrapper.
    """
    B, K = x.shape
    Kw, H = w1.shape
    assert Kw == K, "w1 must be stored as (num_inputs, hidden_size)"

    w1r = w1.astype(jnp.float32)                       # resident, DMA'd once
    b1_row = b1.reshape(1, H).astype(jnp.float32)
    w2_row = w2.reshape(1, H).astype(jnp.float32)      # lane-major row for VPU
    b2_s = b2.reshape(1).astype(jnp.float32)           # SMEM scalar

    x_item = jnp.dtype(x.dtype).itemsize
    vmem_cap = _vmem_capacity_bytes()
    weight_copies = 1 if single_buffer_weights else 2
    resident = weight_copies * (K * H * 4 + 2 * H * 4)
    budget = max(2 * 2 ** 20, vmem_cap // 2 - resident)

    rows = _choose_tile_rows(B, K, H, x_item, budget, block_target_bytes)
    if rows >= B:
        TB, G = B, 1        # whole batch in one step: block == full array
    else:
        TB, G = rows, pl.cdiv(B, rows)   # ragged final tile: OOB reads are
        #                                  unspecified, OOB writes dropped

    # Honest VMEM accounting (weights single- or double-buffered as actually
    # allocated, x/out double-buffered, ~2 live f32 (TB, H) intermediates),
    # with 2x headroom for Mosaic internal scratch — capped per generation.
    need = (resident
            + 2 * TB * K * x_item
            + 2 * TB * 4
            + 2 * TB * H * 4)
    vmem_limit = int(min(int(0.85 * vmem_cap), max(32 * 2 ** 20, 2 * need)))

    resident_kwargs = (
        dict(pipeline_mode=pl.Buffered(1)) if single_buffer_weights else {})

    out = pl.pallas_call(
        critic_kernel,
        out_shape=jax.ShapeDtypeStruct((B, 1), jnp.float32),
        grid_spec=pltpu.PrefetchScalarGridSpec(
            num_scalar_prefetch=0,
            grid=(G,),
            in_specs=[
                # streamed: one batch tile per grid step (pipelined DMA)
                pl.BlockSpec((TB, K), lambda i: (i, 0)),
                # constant index_map (+ single buffer) -> resident in VMEM
                pl.BlockSpec((K, H), lambda i: (0, 0), **resident_kwargs),
                pl.BlockSpec((1, H), lambda i: (0, 0), **resident_kwargs),
                pl.BlockSpec((1, H), lambda i: (0, 0), **resident_kwargs),
                # fc2 bias as an SMEM scalar (free on the scalar slot)
                pl.BlockSpec(memory_space=pltpu.MemorySpace.SMEM),
            ],
            out_specs=pl.BlockSpec((TB, 1), lambda i: (i, 0)),
        ),
        compiler_params=pltpu.CompilerParams(
            # Batch tiles are independent -> shard across TensorCores on v7x.
            dimension_semantics=("parallel",),
            vmem_limit_bytes=vmem_limit,
        ),
    )(x, w1r, b1_row, w2_row, b2_s)
    return out


def init_critic_params(key, num_inputs, hidden_size):
    """Deterministic init mimicking nn.Linear default (U[-1/sqrt(fan_in), +])."""
    k1, k2, k3, k4 = jax.random.split(key, 4)
    bound1 = 1.0 / jnp.sqrt(num_inputs)
    bound2 = 1.0 / jnp.sqrt(hidden_size)
    # stored as (in, out) == PyTorch weight transposed
    w1 = jax.random.uniform(k1, (num_inputs, hidden_size), jnp.float32,
                            -bound1, bound1)
    b1 = jax.random.uniform(k2, (1, hidden_size), jnp.float32, -bound1, bound1)
    w2 = jax.random.uniform(k3, (hidden_size, 1), jnp.float32, -bound2, bound2)
    b2 = jax.random.uniform(k4, (1, 1), jnp.float32, -bound2, bound2)
    return w1, b1, w2, b2


if __name__ == "__main__":
    key = jax.random.PRNGKey(0)
    batch, num_inputs, hidden_size = 2, 16, 32

    k_x, k_p = jax.random.split(key)
    x = jax.random.normal(k_x, (batch, num_inputs), jnp.float32)
    w1, b1, w2, b2 = init_critic_params(k_p, num_inputs, hidden_size)
    ref = jnp.maximum(x @ w1 + b1, 0.0) @ w2 + b2

    # f32 path (exact semantics of the PyTorch module); falls back to default
    # double-buffered weights if this jax build rejects pl.Buffered(1).
    try:
        out = jax.block_until_ready(critic_forward(x, w1, b1, w2, b2))
        single_buf = True
    except Exception:
        single_buf = False
        out = jax.block_until_ready(
            critic_forward(x, w1, b1, w2, b2, single_buffer_weights=False))
    assert out.shape == (batch, 1)
    assert jnp.allclose(out, ref, atol=1e-5, rtol=1e-5)

    # bf16 streamed activations (halves x HBM traffic; f32 accumulation and
    # f32 weights) — checked with a loose tolerance.
    out_bf16 = jax.block_until_ready(
        critic_forward(x.astype(jnp.bfloat16), w1, b1, w2, b2,
                       single_buffer_weights=single_buf))
    assert jnp.allclose(out_bf16, ref, atol=5e-2, rtol=5e-2)

    # Larger batch with a deliberately small per-step byte target so the
    # multi-step pipelined grid and the ragged (non-divisible) final tile are
    # exercised without any wrapper-side padding.
    big_b = 1000
    xb = jax.random.normal(jax.random.PRNGKey(1), (big_b, num_inputs),
                           jnp.float32)
    out_big = jax.block_until_ready(
        critic_forward(xb, w1, b1, w2, b2, block_target_bytes=8 * 1024,
                       single_buffer_weights=single_buf))
    ref_big = jnp.maximum(xb @ w1 + b1, 0.0) @ w2 + b2
    assert out_big.shape == (big_b, 1)
    assert jnp.allclose(out_big, ref_big, atol=1e-4, rtol=1e-4)

    print("KERNEL_OK")
</pallas_src>

<mosaic_0001>
module attributes {stable_mosaic.version = 11 : i64} {
  func.func @critic_kernel(%arg0: i32, %arg1: memref<2x16xf32, #tpu.memory_space<vmem>>, %arg2: memref<16x32xf32, #tpu.memory_space<vmem>>, %arg3: memref<1x32xf32, #tpu.memory_space<vmem>>, %arg4: memref<1x32xf32, #tpu.memory_space<vmem>>, %arg5: memref<1xf32, #tpu.memory_space<smem>>, %arg6: memref<2x1xf32, #tpu.memory_space<vmem>>) attributes {dimension_semantics = [#tpu.dimension_semantics<parallel>], iteration_bounds = array<i64: 1>, scalar_prefetch = 0 : i64, scratch_operands = 0 : i64, tpu.core_type = #tpu.core_type<tc>, window_params = [{transform_indices = @transform_0, window_bounds = array<i64: 2, 16>}, {pipeline_mode = #tpu.pipeline_mode<synchronous>, transform_indices = @transform_1, window_bounds = array<i64: 16, 32>}, {pipeline_mode = #tpu.pipeline_mode<synchronous>, transform_indices = @transform_2, window_bounds = array<i64: 1, 32>}, {pipeline_mode = #tpu.pipeline_mode<synchronous>, transform_indices = @transform_3, window_bounds = array<i64: 1, 32>}, {transform_indices = @transform_4, window_bounds = array<i64: 1>}, {transform_indices = @transform_5, window_bounds = array<i64: 2, 1>}]} {
    %c0 = arith.constant 0 : index
    %c0_0 = arith.constant 0 : index
    %0 = vector.load %arg1[%c0, %c0_0] : memref<2x16xf32, #tpu.memory_space<vmem>>, vector<2x16xf32>
    %c0_1 = arith.constant 0 : index
    %c0_2 = arith.constant 0 : index
    %1 = vector.load %arg2[%c0_1, %c0_2] : memref<16x32xf32, #tpu.memory_space<vmem>>, vector<16x32xf32>
    %cst = arith.constant dense<0.000000e+00> : vector<2x32xf32>
    %2 = tpu.matmul %0, %1, %cst {dimension_numbers = #tpu.dot_dimension_numbers<[1], [0], [0], [1], [0, 0, 1, 1], [], []>} : vector<2x16xf32>, vector<16x32xf32>, vector<2x32xf32> -> vector<2x32xf32>
    %c0_3 = arith.constant 0 : index
    %c0_4 = arith.constant 0 : index
    %3 = vector.load %arg3[%c0_3, %c0_4] : memref<1x32xf32, #tpu.memory_space<vmem>>, vector<1x32xf32>
    %4 = vector.broadcast %3 : vector<1x32xf32> to vector<2x32xf32>
    %5 = arith.addf %2, %4 : vector<2x32xf32>
    %cst_5 = arith.constant 0.000000e+00 : f32
    %6 = vector.broadcast %cst_5 : f32 to vector<2x32xf32>
    %7 = arith.maximumf %5, %6 : vector<2x32xf32>
    %c0_6 = arith.constant 0 : index
    %c0_7 = arith.constant 0 : index
    %8 = vector.load %arg4[%c0_6, %c0_7] : memref<1x32xf32, #tpu.memory_space<vmem>>, vector<1x32xf32>
    %9 = vector.broadcast %8 : vector<1x32xf32> to vector<2x32xf32>
    %10 = arith.mulf %7, %9 : vector<2x32xf32>
    %cst_8 = arith.constant dense<0.000000e+00> : vector<2xf32>
    %11 = vector.multi_reduction <add>, %10, %cst_8 [1] : vector<2x32xf32> to vector<2xf32>
    %12 = vector.shape_cast %11 : vector<2xf32> to vector<2x1xf32>
    %c0_9 = arith.constant 0 : index
    %13 = memref.load %arg5[%c0_9] : memref<1xf32, #tpu.memory_space<smem>>
    %14 = vector.broadcast %13 : f32 to vector<2x1xf32>
    %15 = arith.addf %12, %14 : vector<2x1xf32>
    %c0_10 = arith.constant 0 : index
    %c0_11 = arith.constant 0 : index
    %16 = vector.load %arg6[%c0_10, %c0_11] : memref<2x1xf32, #tpu.memory_space<vmem>>, vector<2x1xf32>
    tpu.vector_store %arg6[%c0_10, %c0_11], %15 {strides = array<i32>} : memref<2x1xf32, #tpu.memory_space<vmem>>, vector<2x1xf32>,
    return
  }
  func.func @transform_0(%arg0: i32) -> (i32, i32) {
    %c0_i32 = arith.constant 0 : i32
    %c0_i32_0 = arith.constant 0 : i32
    return %arg0, %c0_i32 : i32, i32
  }
  func.func @transform_1(%arg0: i32) -> (i32, i32) {
    %c0_i32 = arith.constant 0 : i32
    %c0_i32_0 = arith.constant 0 : i32
    %c0_i32_1 = arith.constant 0 : i32
    return %c0_i32, %c0_i32_0 : i32, i32
  }
  func.func @transform_2(%arg0: i32) -> (i32, i32) {
    %c0_i32 = arith.constant 0 : i32
    %c0_i32_0 = arith.constant 0 : i32
    %c0_i32_1 = arith.constant 0 : i32
    return %c0_i32, %c0_i32_0 : i32, i32
  }
  func.func @transform_3(%arg0: i32) -> (i32, i32) {
    %c0_i32 = arith.constant 0 : i32
    %c0_i32_0 = arith.constant 0 : i32
    %c0_i32_1 = arith.constant 0 : i32
    return %c0_i32, %c0_i32_0 : i32, i32
  }
  func.func @transform_4(%arg0: i32) -> i32 {
    %c0_i32 = arith.constant 0 : i32
    %c0_i32_0 = arith.constant 0 : i32
    return %c0_i32 : i32
  }
  func.func @transform_5(%arg0: i32) -> (i32, i32) {
    %c0_i32 = arith.constant 0 : i32
    %c0_i32_0 = arith.constant 0 : i32
    return %arg0, %c0_i32 : i32, i32
  }
}

module attributes {stable_mosaic.version = 11 : i64} {
  func.func @critic_kernel(%arg0: i32, %arg1: memref<2x16xf32, #tpu.memory_space<vmem>>, %arg2: memref<16x32xf32, #tpu.memory_space<vmem>>, %arg3: memref<1x32xf32, #tpu.memory_space<vmem>>, %arg4: memref<1x32xf32, #tpu.memory_space<vmem>>, %arg5: memref<1xf32, #tpu.memory_space<smem>>, %arg6: memref<2x1xf32, #tpu.memory_space<vmem>>) attributes {dimension_semantics = [#tpu.dimension_semantics<parallel>], iteration_bounds = array<i64: 1>, scalar_prefetch = 0 : i64, scratch_operands = 0 : i64, tpu.core_type = #tpu.core_type<tc>, window_params = [{transform_indices = @transform_0, window_bounds = array<i64: 2, 16>}, {pipeline_mode = #tpu.pipeline_mode<synchronous>, transform_indices = @transform_1, window_bounds = array<i64: 16, 32>}, {pipeline_mode = #tpu.pipeline_mode<synchronous>, transform_indices = @transform_2, window_bounds = array<i64: 1, 32>}, {pipeline_mode = #tpu.pipeline_mode<synchronous>, transform_indices = @transform_3, window_bounds = array<i64: 1, 32>}, {transform_indices = @transform_4, window_bounds = array<i64: 1>}, {transform_indices = @transform_5, window_bounds = array<i64: 2, 1>}]} {
    %c0 = arith.constant 0 : index
    %c0_0 = arith.constant 0 : index
    %0 = vector.load %arg1[%c0, %c0_0] : memref<2x16xf32, #tpu.memory_space<vmem>>, vector<2x16xf32>
    %c0_1 = arith.constant 0 : index
    %c0_2 = arith.constant 0 : index
    %1 = vector.load %arg2[%c0_1, %c0_2] : memref<16x32xf32, #tpu.memory_space<vmem>>, vector<16x32xf32>
    %cst = arith.constant dense<0.000000e+00> : vector<2x32xf32>
    %2 = tpu.matmul %0, %1, %cst {dimension_numbers = #tpu.dot_dimension_numbers<[1], [0], [0], [1], [0, 0, 1, 1], [], []>} : vector<2x16xf32>, vector<16x32xf32>, vector<2x32xf32> -> vector<2x32xf32>
    %c0_3 = arith.constant 0 : index
    %c0_4 = arith.constant 0 : index
    %3 = vector.load %arg3[%c0_3, %c0_4] : memref<1x32xf32, #tpu.memory_space<vmem>>, vector<1x32xf32>
    %4 = vector.broadcast %3 : vector<1x32xf32> to vector<2x32xf32>
    %5 = arith.addf %2, %4 : vector<2x32xf32>
    %cst_5 = arith.constant 0.000000e+00 : f32
    %6 = vector.broadcast %cst_5 : f32 to vector<2x32xf32>
    %7 = arith.maximumf %5, %6 : vector<2x32xf32>
    %c0_6 = arith.constant 0 : index
    %c0_7 = arith.constant 0 : index
    %8 = vector.load %arg4[%c0_6, %c0_7] : memref<1x32xf32, #tpu.memory_space<vmem>>, vector<1x32xf32>
    %9 = vector.broadcast %8 : vector<1x32xf32> to vector<2x32xf32>
    %10 = arith.mulf %7, %9 : vector<2x32xf32>
    %cst_8 = arith.constant dense<0.000000e+00> : vector<2xf32>
    %11 = vector.multi_reduction <add>, %10, %cst_8 [1] : vector<2x32xf32> to vector<2xf32>
    %12 = vector.shape_cast %11 : vector<2xf32> to vector<2x1xf32>
    %c0_9 = arith.constant 0 : index
    %13 = memref.load %arg5[%c0_9] : memref<1xf32, #tpu.memory_space<smem>>
    %14 = vector.broadcast %13 : f32 to vector<2x1xf32>
    %15 = arith.addf %12, %14 : vector<2x1xf32>
    %c0_10 = arith.constant 0 : index
    %c0_11 = arith.constant 0 : index
    %16 = vector.load %arg6[%c0_10, %c0_11] : memref<2x1xf32, #tpu.memory_space<vmem>>, vector<2x1xf32>
    tpu.vector_store %arg6[%c0_10, %c0_11], %15 {strides = array<i32>} : memref<2x1xf32, #tpu.memory_space<vmem>>, vector<2x1xf32>,
    return
  }
  func.func @transform_0(%arg0: i32) -> (i32, i32) {
    %c0_i32 = arith.constant 0 : i32
    %c0_i32_0 = arith.constant 0 : i32
    return %arg0, %c0_i32 : i32, i32
  }
  func.func @transform_1(%arg0: i32) -> (i32, i32) {
    %c0_i32 = arith.constant 0 : i32
    %c0_i32_0 = arith.constant 0 : i32
    %c0_i32_1 = arith.constant 0 : i32
    return %c0_i32, %c0_i32_0 : i32, i32
  }
  func.func @transform_2(%arg0: i32) -> (i32, i32) {
    %c0_i32 = arith.constant 0 : i32
    %c0_i32_0 = arith.constant 0 : i32
    %c0_i32_1 = arith.constant 0 : i32
    return %c0_i32, %c0_i32_0 : i32, i32
  }
  func.func @transform_3(%arg0: i32) -> (i32, i32) {
    %c0_i32 = arith.constant 0 : i32
    %c0_i32_0 = arith.constant 0 : i32
    %c0_i32_1 = arith.constant 0 : i32
    return %c0_i32, %c0_i32_0 : i32, i32
  }
  func.func @transform_4(%arg0: i32) -> i32 {
    %c0_i32 = arith.constant 0 : i32
    %c0_i32_0 = arith.constant 0 : i32
    return %c0_i32 : i32
  }
  func.func @transform_5(%arg0: i32) -> (i32, i32) {
    %c0_i32 = arith.constant 0 : i32
    %c0_i32_0 = arith.constant 0 : i32
    return %arg0, %c0_i32 : i32, i32
  }
}

</mosaic_0001>

<llo_original>
// kernel: critic_forward.1
$region0: #{critic_forward.1}
  #allocation0 [shape = 'u32[]', space=smem, size = 0x4, offset = 0x4, fixed_abs, tag = 'smem constant byte address 0x4 - core index']
  #allocation1 [shape = 'u32[144,128]{1,0:T(1,128)}', space=vmem, size = 0x12000, scoped, tag = 'internal scratch']
  #allocation2 [shape = 'f32[1]{0:T(128)S(6)}', space=smem, size = 0x200, scoped, tag = 'scoped memory for critic_forward.1']
  %s0 = inlined_call_operand.vmem [shape: f32[2,16], index: 0, kind: input, shape index: {}]
  %s1 = inlined_call_operand.hbm [shape: f32[16,32], index: 1, kind: input, shape index: {}]
  %s2 = inlined_call_operand.vmem [shape: f32[1,32], index: 2, kind: input, shape index: {}]
  %s3 = inlined_call_operand.vmem [shape: f32[1,32], index: 3, kind: input, shape index: {}]
  %s4 = inlined_call_operand.<no memory space> [shape: f32[1], index: 4, kind: input, shape index: {}]
  %s5 = inlined_call_operand.vmem [shape: f32[2,1], index: 5, kind: output, shape index: {}]
  %s6 = sld [smem:[#allocation0]]
  $region34: #{critic_forward.1} parent=0
    _
  %s8 = ssub.s32 1, %s6
  %s9 = scalar_select 0, %s8, %s6
  %10 = sst [smem:[#allocation2]] %s4
  $region1: #{critic_forward.1} parent=0
    #allocation3 [shape = 'u8[8192]{0}', space=vmem, size = 0x2000, scoped, tag = 'input window, operand 1, single buffered']
    #allocation4 [shape = 's32[1]{0}', space=sflag, size = 0x4, scoped, tag = 'scoped memory for critic_forward.1']
    %11 = vsyncpa [#allocation4], 0
    // Predicated region
    $region2: #{critic_forward.1} parent=1 // pred_check
      _
    $region3: #{critic_forward.1} parent=1 // pred_check_branch
      %13 = sbr.rel (0) target = $region5
    $region4: #{critic_forward.1} parent=1 // pred_region
      _
    $region5: #{critic_forward.1} parent=1 // pred_fallthru
      _
    // Predicated region
    $region6: #{critic_forward.1} parent=1 // pred_check
      _
    $region7: #{critic_forward.1} parent=1 // pred_check_branch
      %15 = sbr.rel (0) target = $region9
    $region8: #{critic_forward.1} parent=1 // pred_region
      %s17 = ssub.s32 256, 256
      %18 = vsyncadd [#allocation4], %s17
      %s19 = sshll.u32 [#allocation3], 4
      %s20 = int_to_ptr.vmem [resolvable:$true] %s19
      %25 = dma.hbm_to_vmem [thread:$0]  %s1, 256, %s20, [#allocation4], 128, 128, 8
    $region9: #{critic_forward.1} parent=1 // pred_fallthru
      _
    // Predicated region
    $region10: #{critic_forward.1} parent=1 // pred_check
      _
    $region11: #{critic_forward.1} parent=1 // pred_check_branch
      %27 = sbr.rel (0) target = $region13
    $region12: #{critic_forward.1} parent=1 // pred_region
      _
    $region13: #{critic_forward.1} parent=1 // pred_fallthru
      _
    // Predicated region
    $region14: #{critic_forward.1} parent=1 // pred_check
      _
    $region15: #{critic_forward.1} parent=1 // pred_check_branch
      %29 = sbr.rel (0) target = $region17
    $region16: #{critic_forward.1} parent=1 // pred_region
      _
    $region17: #{critic_forward.1} parent=1 // pred_fallthru
      _
    // Predicated region
    $region18: #{critic_forward.1} parent=1 // pred_check
      _
    $region19: #{critic_forward.1} parent=1 // pred_check_branch
      %31 = sbr.rel (0) target = $region21
    $region20: #{critic_forward.1} parent=1 // pred_region
      _
    $region21: #{critic_forward.1} parent=1 // pred_fallthru
      _
    // Predicated region
    $region22: #{critic_forward.1} parent=1 // pred_check
      _
    $region23: #{critic_forward.1} parent=1 // pred_check_branch
      %33 = sbr.rel (0) target = $region25
    $region24: #{critic_forward.1} parent=1 // pred_region
      %34 = dma.done [#allocation4], 256
    $region25: #{critic_forward.1} parent=1 // pred_fallthru
      _
    %v35 = vld [vmem:[%s0] sm:$0x3]
    %v36 = vld [vmem:[#allocation3] sm:$0xff]
    %v37 = vld [vmem:[#allocation3 + $0x8] sm:$0xff]
    %v38 = vld [vmem:[%s2] sm:$0x1]
    %v40 = vlaneseq
    %v41 = vshrl.u32 %v40, 7
    %v42 = vsub.s32 0, %v41
    %v43 = vrot.slane %v38, %v42
    %vm45 = vcmask 130048
    %v47 = vsel %vm45, %v35, 0
    %49 = vmatprep.subr.mxu0 0.0
    %50 = vmatpush1.msra.mxu0 0.0
    %51 = vmatprep.subr.mxu0 0.0
    %52 = vmatpush1.msra.mxu0 0.0
    %53 = vmatprep.subr.mxu0 0.0
    %54 = vmatpush1.msra.mxu0 0.0
    %55 = vmatprep.subr.mxu0 0.0
    %56 = vmatpush1.msra.mxu0 0.0
    %57 = vmatprep.subr.mxu0 0.0
    %58 = vmatpush1.msra.mxu0 0.0
    %59 = vmatprep.subr.mxu0 0.0
    %60 = vmatpush1.msra.mxu0 0.0
    %61 = vmatprep.subr.mxu0 0.0
    %62 = vmatpush1.msra.mxu0 0.0
    %63 = vmatprep.subr.mxu0 0.0
    %64 = vmatpush1.msra.mxu0 0.0
    %65 = vmatprep.subr.mxu0 0.0
    %66 = vmatpush1.msra.mxu0 0.0
    %67 = vmatprep.subr.mxu0 0.0
    %68 = vmatpush1.msra.mxu0 0.0
    %69 = vmatprep.subr.mxu0 0.0
    %70 = vmatpush1.msra.mxu0 0.0
    %71 = vmatprep.subr.mxu0 0.0
    %72 = vmatpush1.msra.mxu0 0.0
    %73 = vmatprep.subr.mxu0 0.0
    %74 = vmatpush1.msra.mxu0 0.0
    %75 = vmatprep.subr.mxu0 0.0
    %76 = vmatpush1.msra.mxu0 0.0
    %77 = vmatprep.subr.mxu0 0.0
    %78 = vmatpush1.msra.mxu0 %v37
    %79 = vmatprep.subr.mxu0 0.0
    %80 = vmatpush1.msra.mxu0 %v36
    %81 = vmatprep.subr.mxu0 0.0
    %82 = vmatpush2.msra.mxu0 0.0
    %83 = vmatprep.subr.mxu0 0.0
    %84 = vmatpush2.msra.mxu0 0.0
    %85 = vmatprep.subr.mxu0 0.0
    %86 = vmatpush2.msra.mxu0 0.0
    %87 = vmatprep.subr.mxu0 0.0
    %88 = vmatpush2.msra.mxu0 0.0
    %89 = vmatprep.subr.mxu0 0.0
    %90 = vmatpush2.msra.mxu0 0.0
    %91 = vmatprep.subr.mxu0 0.0
    %92 = vmatpush2.msra.mxu0 0.0
    %93 = vmatprep.subr.mxu0 0.0
    %94 = vmatpush2.msra.mxu0 0.0
    %95 = vmatprep.subr.mxu0 0.0
    %96 = vmatpush2.msra.mxu0 0.0
    %97 = vmatprep.subr.mxu0 0.0
    %98 = vmatpush2.msra.mxu0 0.0
    %99 = vmatprep.subr.mxu0 0.0
    %100 = vmatpush2.msra.mxu0 0.0
    %101 = vmatprep.subr.mxu0 0.0
    %102 = vmatpush2.msra.mxu0 0.0
    %103 = vmatprep.subr.mxu0 0.0
    %104 = vmatpush2.msra.mxu0 0.0
    %105 = vmatprep.subr.mxu0 0.0
    %106 = vmatpush2.msra.mxu0 0.0
    %107 = vmatprep.subr.mxu0 0.0
    %108 = vmatpush2.msra.mxu0 0.0
    %109 = vmatprep.subr.mxu0 0.0
    %110 = vmatpush2.msra.mxu0 0.0
    %111 = vmatprep.subr.mxu0 0.0
    %112 = vmatpush2.msra.mxu0 0.0
    %113 = vmatprep.mubr.f32.mxu0 0.0
    %114 = vmatmul.mubr.f32.gmra.mxu0 %v47
    %v115 = vpop.f32.mrf.mxu0
    %v116 = vadd.f32 %v43, %v115
    %v117 = vpop.f32.mrf.mxu0
    %118 = vdwg.mxu0
    %v119 = vmax.f32 %v116, 0.0
    %v120 = vld [vmem:[%s3] sm:$0x1]
    %v122 = vlaneseq
    %v123 = vshrl.u32 %v122, 7
    %v124 = vsub.s32 0, %v123
    %v125 = vrot.slane %v120, %v124
    %v127 = vmul.f32 %v119, %v125
    %vm128 = vcmask 254976
    %v129 = vsel %vm128, %v127, 0.0
    %130 = vadd.xlane.f32.xlu0 %v129
    %v131 = vpop.xlane.xlu0 %130
    %s132 = sld [smem:[#allocation2]]
    %v133 = vstv %s132
    %v134 = vadd.f32 %v131, %v133
    %vm135 = vcmask 1024
    %136 = vst.msk [vmem:[%s5] sm:$0x3] %vm135, %v134
    // Predicated region
    $region26: #{critic_forward.1} parent=1 // pred_check
      _
    $region27: #{critic_forward.1} parent=1 // pred_check_branch
      %138 = sbr.rel (0) target = $region29
    $region28: #{critic_forward.1} parent=1 // pred_region
      _
    $region29: #{critic_forward.1} parent=1 // pred_fallthru
      _
    // Predicated region
    $region30: #{critic_forward.1} parent=1 // pred_check
      _
    $region31: #{critic_forward.1} parent=1 // pred_check_branch
      %140 = sbr.rel (0) target = $region33
    $region32: #{critic_forward.1} parent=1 // pred_region
      _
    $region33: #{critic_forward.1} parent=1 // pred_fallthru
      _
    %141 = vsyncpa [#allocation4], 1

// kernel: critic_forward.1
$region0: #{critic_forward.1}
  #allocation0 [shape = 'u32[]', space=smem, size = 0x4, offset = 0x4, fixed_abs, tag = 'smem constant byte address 0x4 - core index']
  #allocation1 [shape = 'u32[144,128]{1,0:T(1,128)}', space=vmem, size = 0x12000, scoped, tag = 'internal scratch']
  #allocation2 [shape = 'f32[1]{0:T(128)S(6)}', space=smem, size = 0x200, scoped, tag = 'scoped memory for critic_forward.1']
  %s0 = inlined_call_operand.vmem [shape: f32[2,16], index: 0, kind: input, shape index: {}]
  %s1 = inlined_call_operand.hbm [shape: f32[16,32], index: 1, kind: input, shape index: {}]
  %s2 = inlined_call_operand.vmem [shape: f32[1,32], index: 2, kind: input, shape index: {}]
  %s3 = inlined_call_operand.vmem [shape: f32[1,32], index: 3, kind: input, shape index: {}]
  %s4 = inlined_call_operand.<no memory space> [shape: f32[1], index: 4, kind: input, shape index: {}]
  %s5 = inlined_call_operand.vmem [shape: f32[2,1], index: 5, kind: output, shape index: {}]
  %s6 = sld [smem:[#allocation0]]
  $region34: #{critic_forward.1} parent=0
    _
  %s8 = ssub.s32 1, %s6
  %s9 = scalar_select 0, %s8, %s6
  %10 = sst [smem:[#allocation2]] %s4
  $region1: #{critic_forward.1} parent=0
    #allocation3 [shape = 'u8[8192]{0}', space=vmem, size = 0x2000, scoped, tag = 'input window, operand 1, single buffered']
    #allocation4 [shape = 's32[1]{0}', space=sflag, size = 0x4, scoped, tag = 'scoped memory for critic_forward.1']
    %11 = vsyncpa [#allocation4], 0
    // Predicated region
    $region2: #{critic_forward.1} parent=1 // pred_check
      _
    $region3: #{critic_forward.1} parent=1 // pred_check_branch
      %13 = sbr.rel (0) target = $region5
    $region4: #{critic_forward.1} parent=1 // pred_region
      _
    $region5: #{critic_forward.1} parent=1 // pred_fallthru
      _
    // Predicated region
    $region6: #{critic_forward.1} parent=1 // pred_check
      _
    $region7: #{critic_forward.1} parent=1 // pred_check_branch
      %15 = sbr.rel (0) target = $region9
    $region8: #{critic_forward.1} parent=1 // pred_region
      %s17 = ssub.s32 256, 256
      %18 = vsyncadd [#allocation4], %s17
      %s19 = sshll.u32 [#allocation3], 4
      %s20 = int_to_ptr.vmem [resolvable:$true] %s19
      %25 = dma.hbm_to_vmem [thread:$0]  %s1, 256, %s20, [#allocation4], 128, 128, 8
    $region9: #{critic_forward.1} parent=1 // pred_fallthru
      _
    // Predicated region
    $region10: #{critic_forward.1} parent=1 // pred_check
      _
    $region11: #{critic_forward.1} parent=1 // pred_check_branch
      %27 = sbr.rel (0) target = $region13
    $region12: #{critic_forward.1} parent=1 // pred_region
      _
    $region13: #{critic_forward.1} parent=1 // pred_fallthru
      _
    // Predicated region
    $region14: #{critic_forward.1} parent=1 // pred_check
      _
    $region15: #{critic_forward.1} parent=1 // pred_check_branch
      %29 = sbr.rel (0) target = $region17
    $region16: #{critic_forward.1} parent=1 // pred_region
      _
    $region17: #{critic_forward.1} parent=1 // pred_fallthru
      _
    // Predicated region
    $region18: #{critic_forward.1} parent=1 // pred_check
      _
    $region19: #{critic_forward.1} parent=1 // pred_check_branch
      %31 = sbr.rel (0) target = $region21
    $region20: #{critic_forward.1} parent=1 // pred_region
      _
    $region21: #{critic_forward.1} parent=1 // pred_fallthru
      _
    // Predicated region
    $region22: #{critic_forward.1} parent=1 // pred_check
      _
    $region23: #{critic_forward.1} parent=1 // pred_check_branch
      %33 = sbr.rel (0) target = $region25
    $region24: #{critic_forward.1} parent=1 // pred_region
      %34 = dma.done [#allocation4], 256
    $region25: #{critic_forward.1} parent=1 // pred_fallthru
      _
    %v35 = vld [vmem:[%s0] sm:$0x3]
    %v36 = vld [vmem:[#allocation3] sm:$0xff]
    %v37 = vld [vmem:[#allocation3 + $0x8] sm:$0xff]
    %v38 = vld [vmem:[%s2] sm:$0x1]
    %v40 = vlaneseq
    %v41 = vshrl.u32 %v40, 7
    %v42 = vsub.s32 0, %v41
    %v43 = vrot.slane %v38, %v42
    %vm45 = vcmask 130048
    %v47 = vsel %vm45, %v35, 0
    %49 = vmatprep.subr.mxu0 0.0
    %50 = vmatpush1.msra.mxu0 0.0
    %51 = vmatprep.subr.mxu0 0.0
    %52 = vmatpush1.msra.mxu0 0.0
    %53 = vmatprep.subr.mxu0 0.0
    %54 = vmatpush1.msra.mxu0 0.0
    %55 = vmatprep.subr.mxu0 0.0
    %56 = vmatpush1.msra.mxu0 0.0
    %57 = vmatprep.subr.mxu0 0.0
    %58 = vmatpush1.msra.mxu0 0.0
    %59 = vmatprep.subr.mxu0 0.0
    %60 = vmatpush1.msra.mxu0 0.0
    %61 = vmatprep.subr.mxu0 0.0
    %62 = vmatpush1.msra.mxu0 0.0
    %63 = vmatprep.subr.mxu0 0.0
    %64 = vmatpush1.msra.mxu0 0.0
    %65 = vmatprep.subr.mxu0 0.0
    %66 = vmatpush1.msra.mxu0 0.0
    %67 = vmatprep.subr.mxu0 0.0
    %68 = vmatpush1.msra.mxu0 0.0
    %69 = vmatprep.subr.mxu0 0.0
    %70 = vmatpush1.msra.mxu0 0.0
    %71 = vmatprep.subr.mxu0 0.0
    %72 = vmatpush1.msra.mxu0 0.0
    %73 = vmatprep.subr.mxu0 0.0
    %74 = vmatpush1.msra.mxu0 0.0
    %75 = vmatprep.subr.mxu0 0.0
    %76 = vmatpush1.msra.mxu0 0.0
    %77 = vmatprep.subr.mxu0 0.0
    %78 = vmatpush1.msra.mxu0 %v37
    %79 = vmatprep.subr.mxu0 0.0
    %80 = vmatpush1.msra.mxu0 %v36
    %81 = vmatprep.subr.mxu0 0.0
    %82 = vmatpush2.msra.mxu0 0.0
    %83 = vmatprep.subr.mxu0 0.0
    %84 = vmatpush2.msra.mxu0 0.0
    %85 = vmatprep.subr.mxu0 0.0
    %86 = vmatpush2.msra.mxu0 0.0
    %87 = vmatprep.subr.mxu0 0.0
    %88 = vmatpush2.msra.mxu0 0.0
    %89 = vmatprep.subr.mxu0 0.0
    %90 = vmatpush2.msra.mxu0 0.0
    %91 = vmatprep.subr.mxu0 0.0
    %92 = vmatpush2.msra.mxu0 0.0
    %93 = vmatprep.subr.mxu0 0.0
    %94 = vmatpush2.msra.mxu0 0.0
    %95 = vmatprep.subr.mxu0 0.0
    %96 = vmatpush2.msra.mxu0 0.0
    %97 = vmatprep.subr.mxu0 0.0
    %98 = vmatpush2.msra.mxu0 0.0
    %99 = vmatprep.subr.mxu0 0.0
    %100 = vmatpush2.msra.mxu0 0.0
    %101 = vmatprep.subr.mxu0 0.0
    %102 = vmatpush2.msra.mxu0 0.0
    %103 = vmatprep.subr.mxu0 0.0
    %104 = vmatpush2.msra.mxu0 0.0
    %105 = vmatprep.subr.mxu0 0.0
    %106 = vmatpush2.msra.mxu0 0.0
    %107 = vmatprep.subr.mxu0 0.0
    %108 = vmatpush2.msra.mxu0 0.0
    %109 = vmatprep.subr.mxu0 0.0
    %110 = vmatpush2.msra.mxu0 0.0
    %111 = vmatprep.subr.mxu0 0.0
    %112 = vmatpush2.msra.mxu0 0.0
    %113 = vmatprep.mubr.f32.mxu0 0.0
    %114 = vmatmul.mubr.f32.gmra.mxu0 %v47
    %v115 = vpop.f32.mrf.mxu0
    %v116 = vadd.f32 %v43, %v115
    %v117 = vpop.f32.mrf.mxu0
    %118 = vdwg.mxu0
    %v119 = vmax.f32 %v116, 0.0
    %v120 = vld [vmem:[%s3] sm:$0x1]
    %v122 = vlaneseq
    %v123 = vshrl.u32 %v122, 7
    %v124 = vsub.s32 0, %v123
    %v125 = vrot.slane %v120, %v124
    %v127 = vmul.f32 %v119, %v125
    %vm128 = vcmask 254976
    %v129 = vsel %vm128, %v127, 0.0
    %130 = vadd.xlane.f32.xlu0 %v129
    %v131 = vpop.xlane.xlu0 %130
    %s132 = sld [smem:[#allocation2]]
    %v133 = vstv %s132
    %v134 = vadd.f32 %v131, %v133
    %vm135 = vcmask 1024
    %136 = vst.msk [vmem:[%s5] sm:$0x3] %vm135, %v134
    // Predicated region
    $region26: #{critic_forward.1} parent=1 // pred_check
      _
    $region27: #{critic_forward.1} parent=1 // pred_check_branch
      %138 = sbr.rel (0) target = $region29
    $region28: #{critic_forward.1} parent=1 // pred_region
      _
    $region29: #{critic_forward.1} parent=1 // pred_fallthru
      _
    // Predicated region
    $region30: #{critic_forward.1} parent=1 // pred_check
      _
    $region31: #{critic_forward.1} parent=1 // pred_check_branch
      %140 = sbr.rel (0) target = $region33
    $region32: #{critic_forward.1} parent=1 // pred_region
      _
    $region33: #{critic_forward.1} parent=1 // pred_fallthru
      _
    %141 = vsyncpa [#allocation4], 1

</llo_original>
